<compile_context>
chip_gen: v6e
topology: v6e:2x2x1
jax: 0.10.0
libtpu: 0.0.40
codegen_flags: <defaults>
</compile_context>

<pallas_src>
import jax
import jax.numpy as jnp
from jax.experimental import pallas as pl
from jax.experimental.pallas import tpu as pltpu


LANE = 128                    # TPU lane width
MIB = 1024 * 1024


def _round_up(x, m):
    return (x + m - 1) // m * m


def _choose_tiling(n_nodes):
    """Pick (n_pad, tile): pad N so the dst axis has >= 2 tiles (v7x megacore
    keeps both TensorCores busy) with the largest reasonable tile so the
    per-step ~0.35us overhead and adjacency refetch stay negligible."""
    for t in (1024, 512, 256, 128):
        n_pad = _round_up(max(n_nodes, 2 * t), 2 * t)
        waste = n_pad - n_nodes
        if waste <= max(t, n_nodes // 3) or t == 128:
            return n_pad, t
    return _round_up(max(n_nodes, 256), 256), 128


def _vmem_limit(est_bytes):
    """Explicit scoped-VMEM limit (v5e default is only 16 MiB); stay well under
    the v7x 64 MiB physical ceiling."""
    return int(min(48 * MIB, max(32 * MIB, 2 * est_bytes)))


# ----------------------- tiled propagation:  A_norm @ H --------------------- #

def _make_spmm_resident_kernel(tk):
    """x is fully VMEM-resident; slice its k-rows in-kernel (no re-streaming
    of the feature operand per dst tile)."""
    def kernel(a_ref, x_ref, o_ref, acc_ref):
        k = pl.program_id(1)

        @pl.when(k == 0)
        def _():
            acc_ref[...] = jnp.zeros_like(acc_ref)

        start = pl.multiple_of(k * tk, tk)
        acc_ref[...] += jnp.dot(a_ref[...], x_ref[pl.ds(start, tk), :],
                                preferred_element_type=jnp.float32)

        @pl.when(k == pl.num_programs(1) - 1)
        def _():
            o_ref[...] = acc_ref[...].astype(o_ref.dtype)
    return kernel


def _spmm_stream_kernel(a_ref, x_ref, o_ref, acc_ref):
    k = pl.program_id(1)

    @pl.when(k == 0)
    def _():
        acc_ref[...] = jnp.zeros_like(acc_ref)

    acc_ref[...] += jnp.dot(a_ref[...], x_ref[...],
                            preferred_element_type=jnp.float32)

    @pl.when(k == pl.num_programs(1) - 1)
    def _():
        o_ref[...] = acc_ref[...].astype(o_ref.dtype)


def pallas_spmm(adj, x, tm, tk):
    """Tiled dense propagation adj @ x.

    adj: [N_pad, N_pad] bf16   x: [N_pad, D_pad] bf16  ->  [N_pad, D_pad] bf16
    dst tiles are "parallel" (megacore), src tiles are the trailing reduction.
    """
    n_pad = adj.shape[0]
    d_pad = x.shape[1]
    x_bytes = n_pad * d_pad * 2
    # guard against the v7x 64 MiB VMEM ceiling (assume double-buffered copy)
    resident_x = 2 * x_bytes <= 24 * MIB

    if resident_x:
        kernel = _make_spmm_resident_kernel(tk)
        x_spec = pl.BlockSpec((n_pad, d_pad), lambda i, k: (0, 0))
        est = 2 * x_bytes
    else:
        kernel = _spmm_stream_kernel
        x_spec = pl.BlockSpec((tk, d_pad), lambda i, k: (k, 0))
        est = 2 * tk * d_pad * 2
    est += 2 * tm * tk * 2 + 2 * tm * d_pad * 2 + tm * d_pad * 4

    return pl.pallas_call(
        kernel,
        out_shape=jax.ShapeDtypeStruct((n_pad, d_pad), jnp.bfloat16),
        grid=(n_pad // tm, n_pad // tk),
        in_specs=[
            pl.BlockSpec((tm, tk), lambda i, k: (i, k)),
            x_spec,
        ],
        out_specs=pl.BlockSpec((tm, d_pad), lambda i, k: (i, 0)),
        scratch_shapes=[pltpu.VMEM((tm, d_pad), jnp.float32)],
        compiler_params=pltpu.CompilerParams(
            dimension_semantics=("parallel", "arbitrary"),
            vmem_limit_bytes=_vmem_limit(est),
        ),
    )(adj, x)


# ----------- packed projection (+ELU) with optional fused fc_out ------------ #

def _make_project_kernel(n_p, fuse_out):
    """All powers are unrolled in one body.  Each W_j occupies the column band
    [j*hid:(j+1)*hid] of a packed (d_pad, hid_pack) bf16 matrix, so the sum of
    the per-power dots IS the packed concatenation (no jnp.concatenate, one
    lane-dense store).  ELU(0) = 0 keeps the padding columns zero."""
    def kernel(*refs):
        x_refs = refs[:n_p]
        w_ref = refs[n_p]
        if fuse_out:
            wo_ref, h_ref, out_ref = refs[n_p + 1], refs[n_p + 2], refs[n_p + 3]
        else:
            h_ref = refs[n_p + 1]

        acc = jnp.dot(x_refs[0][...], w_ref[0],
                      preferred_element_type=jnp.float32)
        for j in range(1, n_p):
            acc += jnp.dot(x_refs[j][...], w_ref[j],
                           preferred_element_type=jnp.float32)
        # ELU: expm1 only on the non-positive branch (no overflow risk).
        act = jnp.where(acc > 0, acc, jnp.expm1(jnp.minimum(acc, 0.0)))
        h_ref[...] = act.astype(h_ref.dtype)
        if fuse_out:
            # fused fc_layers: out = ELU(packed) @ W_out  (bf16 MXU, f32 acc)
            out_ref[...] = jnp.dot(act.astype(jnp.bfloat16), wo_ref[...],
                                   preferred_element_type=jnp.float32)
    return kernel


def pallas_project(power_feats, w_pack, wo_pack, tm):
    """power_feats: list of n_p arrays [N_pad, D_pad] bf16 (A^j h, no stack)
       w_pack:  [n_p, D_pad, hid_pack] bf16, VMEM-resident
       wo_pack: [hid_pack, OUT_pad] bf16 or None (last layer fuses fc_out)
       -> h [N_pad, hid_pack] bf16 (+ out [N_pad, OUT_pad] f32 if fused)."""
    n_p = len(power_feats)
    n_pad, d_pad = power_feats[0].shape
    hid_pack = w_pack.shape[-1]
    fuse_out = wo_pack is not None

    in_specs = [pl.BlockSpec((tm, d_pad), lambda i: (i, 0)) for _ in range(n_p)]
    # weight stacks stay resident in VMEM (constant index_map -> single DMA)
    in_specs.append(pl.BlockSpec((n_p, d_pad, hid_pack), lambda i: (0, 0, 0)))
    est = (n_p * 2 * tm * d_pad * 2 + 2 * n_p * d_pad * hid_pack * 2
           + 2 * tm * hid_pack * 2)
    args = list(power_feats) + [w_pack]

    if fuse_out:
        out_pad = wo_pack.shape[-1]
        in_specs.append(pl.BlockSpec((hid_pack, out_pad), lambda i: (0, 0)))
        out_shape = (jax.ShapeDtypeStruct((n_pad, hid_pack), jnp.bfloat16),
                     jax.ShapeDtypeStruct((n_pad, out_pad), jnp.float32))
        out_specs = (pl.BlockSpec((tm, hid_pack), lambda i: (i, 0)),
                     pl.BlockSpec((tm, out_pad), lambda i: (i, 0)))
        est += 2 * hid_pack * out_pad * 2 + 2 * tm * out_pad * 4
        args.append(wo_pack)
    else:
        out_shape = jax.ShapeDtypeStruct((n_pad, hid_pack), jnp.bfloat16)
        out_specs = pl.BlockSpec((tm, hid_pack), lambda i: (i, 0))

    return pl.pallas_call(
        _make_project_kernel(n_p, fuse_out),
        out_shape=out_shape,
        grid=(n_pad // tm,),
        in_specs=in_specs,
        out_specs=out_specs,
        compiler_params=pltpu.CompilerParams(
            dimension_semantics=("parallel",),
            vmem_limit_bytes=_vmem_limit(est),
        ),
    )(*args)


# ------------------------------ JAX glue ----------------------------------- #

def build_etype_norm_adjs(n_nodes, n_pad, src, dst, e_feat, num_etypes):
    """Per-edge-type symmetric-normalized dense adjacencies, built ONCE and
    cached in bf16 (largest persistent buffer); layers combine them with
    cheap scalar gates."""
    deg = jnp.zeros((n_nodes,), jnp.float32).at[dst].add(1.0)
    norm = jnp.maximum(deg, 1.0) ** -0.5
    adjs = []
    for t in range(num_etypes):
        w = (e_feat == t).astype(jnp.float32)
        a = jnp.zeros((n_nodes, n_nodes), jnp.float32).at[dst, src].add(w)
        a = norm[:, None] * a * norm[None, :]
        a = jnp.pad(a, ((0, n_pad - n_nodes), (0, n_pad - n_nodes)))
        adjs.append(a.astype(jnp.bfloat16))
    return jnp.stack(adjs, axis=0)            # [T, N_pad, N_pad] bf16


def _pack_conv_weights(w_stack, d_pad, hid_pack):
    """[n_p, d_real, hid] f32 -> [n_p, d_pad, hid_pack] bf16 with W_j placed in
    rows [0:d_real] and columns [j*hid:(j+1)*hid] (dense packed layout)."""
    n_p, d_real, hid = w_stack.shape
    wp = jnp.zeros((n_p, d_pad, hid_pack), jnp.bfloat16)
    for j in range(n_p):
        wp = wp.at[j, :d_real, j * hid:(j + 1) * hid].set(
            w_stack[j].astype(jnp.bfloat16))
    return wp


def _pack_fc_out(w_out, hid_pack, out_pad):
    wo = jnp.zeros((hid_pack, out_pad), jnp.bfloat16)
    return wo.at[:w_out.shape[0], :w_out.shape[1]].set(
        w_out.astype(jnp.bfloat16))


def remixhop_forward(params, features_list, src, dst, e_feat, p, num_layers):
    p = tuple(p)
    n_p = len(p)
    hid = params["conv_w"][0].shape[-1]
    out_dim = params["fc_out"].shape[-1]
    num_etypes = params["rel_emb"][0].shape[0]

    # per node-type input projections: sub-vreg matmuls -> plain XLA, then concat
    hs = [f @ w + b for f, w, b in
          zip(features_list, params["fc_w"], params["fc_b"])]
    h = jnp.concatenate(hs, axis=0)                      # [N, in_dim] f32
    n_nodes, in_dim = h.shape

    n_pad, tm = _choose_tiling(n_nodes)
    tk = tm

    adjs = build_etype_norm_adjs(n_nodes, n_pad, src, dst, e_feat, num_etypes)

    d_pad = _round_up(in_dim, LANE)
    hid_pack = _round_up(n_p * hid, LANE)                # packed hidden slab
    out_pad = _round_up(out_dim, LANE)

    # pad node features into a lane-dense slab
    h_pad = jnp.zeros((n_pad, d_pad), jnp.bfloat16)
    h_pad = h_pad.at[:n_nodes, :in_dim].set(h.astype(jnp.bfloat16))

    out_padded = None
    for layer in range(num_layers):
        # per-layer relation gates -> cheap scalar-weighted sum of cached adjs
        gates = jax.nn.sigmoid(params["rel_emb"][layer] @ params["rel_w"][layer])
        adj = jnp.einsum("t,tij->ij", gates, adjs,
                         preferred_element_type=jnp.float32).astype(jnp.bfloat16)

        # propagate the powers A^j h with the tiled Pallas spmm
        powers = {}
        cur = h_pad
        if 0 in p:
            powers[0] = cur
        for j in range(1, max(p) + 1):
            cur = pallas_spmm(adj, cur, tm, tk)
            if j in p:
                powers[j] = cur
        power_feats = [powers[j] for j in p]   # separate arrays, no stack copy

        w_pack = _pack_conv_weights(params["conv_w"][layer], d_pad, hid_pack)
        if layer == num_layers - 1:
            wo_pack = _pack_fc_out(params["fc_out"], hid_pack, out_pad)
            h_pad, out_padded = pallas_project(power_feats, w_pack, wo_pack, tm)
        else:
            h_pad = pallas_project(power_feats, w_pack, None, tm)
        # (dropout between layers is identity in eval mode)
        d_pad = hid_pack

    # packed layout: real columns are simply the first n_p*hid lanes
    h_out = h_pad[:n_nodes, :n_p * hid].astype(jnp.float32)
    out = out_padded[:n_nodes, :out_dim]
    return out, h_out


# ------------------------- params / reference / main ------------------------ #

def xavier_normal(key, shape, gain):
    fan_in, fan_out = shape[0], shape[1]
    std = gain * (2.0 / (fan_in + fan_out)) ** 0.5
    return std * jax.random.normal(key, shape, jnp.float32)


def init_params(key, num_etypes, R, in_dim, hid_dim, out_dim, num_layers,
                feats_dim_list, p):
    keys = iter(jax.random.split(key, 128))
    params = {}
    params["fc_w"] = [xavier_normal(next(keys), (fd, in_dim), 1.414)
                      for fd in feats_dim_list]
    params["fc_b"] = [0.01 * jax.random.normal(next(keys), (in_dim,), jnp.float32)
                      for _ in feats_dim_list]
    layer_in_dims = [in_dim] + [hid_dim * len(p)] * (num_layers - 1)
    params["conv_w"], params["rel_emb"], params["rel_w"] = [], [], []
    for din in layer_in_dims:
        params["conv_w"].append(
            jnp.stack([xavier_normal(next(keys), (din, hid_dim), 1.0) for _ in p]))
        params["rel_emb"].append(
            0.1 * jax.random.normal(next(keys), (num_etypes, R), jnp.float32))
        params["rel_w"].append(
            0.1 * jax.random.normal(next(keys), (R,), jnp.float32))
    params["fc_out"] = xavier_normal(next(keys), (hid_dim * len(p), out_dim), 1.0)
    return params


def reference_forward(params, features_list, src, dst, e_feat, p, num_layers):
    """Pure-JAX f32 reference of the same forward semantics (sanity check)."""
    p = tuple(p)
    hs = [f @ w + b for f, w, b in
          zip(features_list, params["fc_w"], params["fc_b"])]
    h = jnp.concatenate(hs, axis=0)
    n = h.shape[0]
    deg = jnp.zeros((n,), jnp.float32).at[dst].add(1.0)
    norm = jnp.maximum(deg, 1.0) ** -0.5
    for layer in range(num_layers):
        gate = jax.nn.sigmoid(params["rel_emb"][layer] @ params["rel_w"][layer])
        a = jnp.zeros((n, n), jnp.float32).at[dst, src].add(gate[e_feat])
        a = norm[:, None] * a * norm[None, :]
        powers, cur = {}, h
        if 0 in p:
            powers[0] = cur
        for j in range(1, max(p) + 1):
            cur = a @ cur
            if j in p:
                powers[j] = cur
        proj = [powers[j] @ params["conv_w"][layer][idx]
                for idx, j in enumerate(p)]
        h = jnp.concatenate(proj, axis=1)
        h = jnp.where(h > 0, h, jnp.expm1(jnp.minimum(h, 0.0)))
    out = h @ params["fc_out"]
    return out, h


if __name__ == "__main__":
    key = jax.random.PRNGKey(0)
    num_etypes, R = 3, 8
    in_dim, hid_dim, out_dim = 16, 16, 8
    num_layers = 2
    p = (0, 1, 2)
    feats_dim_list = [12, 20]
    node_counts = [10, 14]
    N = sum(node_counts)
    E = 64

    k_feat, k_src, k_dst, k_ef, k_par = jax.random.split(key, 5)
    fk = jax.random.split(k_feat, len(feats_dim_list))
    features_list = [jax.random.normal(kk, (nc, fd), jnp.float32)
                     for kk, nc, fd in zip(fk, node_counts, feats_dim_list)]
    src = jax.random.randint(k_src, (E,), 0, N)
    dst = jax.random.randint(k_dst, (E,), 0, N)
    e_feat = jax.random.randint(k_ef, (E,), 0, num_etypes)

    params = init_params(k_par, num_etypes, R, in_dim, hid_dim, out_dim,
                         num_layers, feats_dim_list, p)

    out, h = remixhop_forward(params, features_list, src, dst, e_feat, p,
                              num_layers)
    jax.block_until_ready(out)
    jax.block_until_ready(h)

    assert out.shape == (N, out_dim), out.shape
    assert h.shape == (N, hid_dim * len(p)), h.shape
    assert bool(jnp.all(jnp.isfinite(out))) and bool(jnp.all(jnp.isfinite(h)))

    # bf16 adjacency/features/weights -> loose tolerance against the f32 reference.
    out_ref, h_ref = reference_forward(params, features_list, src, dst, e_feat,
                                       p, num_layers)
    assert jnp.allclose(out, out_ref, rtol=0.1, atol=0.1), \
        float(jnp.max(jnp.abs(out - out_ref)))
    assert jnp.allclose(h, h_ref, rtol=0.1, atol=0.1), \
        float(jnp.max(jnp.abs(h - h_ref)))

    print("KERNEL_OK")
</pallas_src>

<mosaic_0001>
module attributes {stable_mosaic.version = 11 : i64} {
  func.func @kernel(%arg0: i32, %arg1: i32, %arg2: memref<128x128xbf16, #tpu.memory_space<vmem>>, %arg3: memref<256x128xbf16, #tpu.memory_space<vmem>>, %arg4: memref<128x128xbf16, #tpu.memory_space<vmem>>, %arg5: memref<128x128xf32, #tpu.memory_space<vmem>>) attributes {dimension_semantics = [#tpu.dimension_semantics<parallel>, #tpu.dimension_semantics<arbitrary>], iteration_bounds = array<i64: 2, 2>, scalar_prefetch = 0 : i64, scratch_operands = 1 : i64, tpu.core_type = #tpu.core_type<tc>, window_params = [{transform_indices = @transform_0, window_bounds = array<i64: 128, 128>}, {pipeline_mode = #tpu.pipeline_mode<synchronous>, transform_indices = @transform_1, window_bounds = array<i64: 256, 128>}, {transform_indices = @transform_2, window_bounds = array<i64: 128, 128>}]} {
    %c0_i32 = arith.constant 0 : i32
    %0 = arith.cmpi eq, %arg1, %c0_i32 : i32
    %1 = arith.extui %0 : i1 to i32
    %c0_i32_0 = arith.constant 0 : i32
    %2 = arith.cmpi ne, %1, %c0_i32_0 : i32
    scf.if %2 {
      %cst_8 = arith.constant 0.000000e+00 : f32
      %15 = vector.broadcast %cst_8 : f32 to vector<128x128xf32>
      %c0_9 = arith.constant 0 : index
      %c0_10 = arith.constant 0 : index
      %16 = vector.load %arg5[%c0_9, %c0_10] : memref<128x128xf32, #tpu.memory_space<vmem>>, vector<128x128xf32>
      tpu.vector_store %arg5[%c0_9, %c0_10], %15 {strides = array<i32>} : memref<128x128xf32, #tpu.memory_space<vmem>>, vector<128x128xf32>,
    } else {
    }
    %c128_i32 = arith.constant 128 : i32
    %3 = arith.muli %arg1, %c128_i32 : i32
    %4 = tpu.assume_multiple %3, 128 : i32
    %c0 = arith.constant 0 : index
    %c0_1 = arith.constant 0 : index
    %5 = vector.load %arg5[%c0, %c0_1] : memref<128x128xf32, #tpu.memory_space<vmem>>, vector<128x128xf32>
    %c0_2 = arith.constant 0 : index
    %c0_3 = arith.constant 0 : index
    %6 = vector.load %arg2[%c0_2, %c0_3] : memref<128x128xbf16, #tpu.memory_space<vmem>>, vector<128x128xbf16>
    %7 = arith.index_cast %4 : i32 to index
    %c0_4 = arith.constant 0 : index
    %8 = vector.load %arg3[%7, %c0_4] : memref<256x128xbf16, #tpu.memory_space<vmem>>, vector<128x128xbf16>
    %cst = arith.constant dense<0.000000e+00> : vector<128x128xf32>
    %9 = tpu.matmul %6, %8, %cst {dimension_numbers = #tpu.dot_dimension_numbers<[1], [0], [0], [1], [0, 0, 1, 1], [], []>} : vector<128x128xbf16>, vector<128x128xbf16>, vector<128x128xf32> -> vector<128x128xf32>
    %10 = arith.addf %5, %9 : vector<128x128xf32>
    %c0_5 = arith.constant 0 : index
    %c0_6 = arith.constant 0 : index
    %11 = vector.load %arg5[%c0_5, %c0_6] : memref<128x128xf32, #tpu.memory_space<vmem>>, vector<128x128xf32>
    tpu.vector_store %arg5[%c0_5, %c0_6], %10 {strides = array<i32>} : memref<128x128xf32, #tpu.memory_space<vmem>>, vector<128x128xf32>,
    %c1_i32 = arith.constant 1 : i32
    %12 = arith.cmpi eq, %arg1, %c1_i32 : i32
    %13 = arith.extui %12 : i1 to i32
    %c0_i32_7 = arith.constant 0 : i32
    %14 = arith.cmpi ne, %13, %c0_i32_7 : i32
    scf.if %14 {
      %c0_8 = arith.constant 0 : index
      %c0_9 = arith.constant 0 : index
      %15 = vector.load %arg5[%c0_8, %c0_9] : memref<128x128xf32, #tpu.memory_space<vmem>>, vector<128x128xf32>
      %16 = arith.truncf %15 : vector<128x128xf32> to vector<128x128xbf16>
      %c0_10 = arith.constant 0 : index
      %c0_11 = arith.constant 0 : index
      %17 = vector.load %arg4[%c0_10, %c0_11] : memref<128x128xbf16, #tpu.memory_space<vmem>>, vector<128x128xbf16>
      tpu.vector_store %arg4[%c0_10, %c0_11], %16 {strides = array<i32>} : memref<128x128xbf16, #tpu.memory_space<vmem>>, vector<128x128xbf16>,
    } else {
    }
    return
  }
  func.func @transform_0(%arg0: i32, %arg1: i32) -> (i32, i32) {
    %c0_i32 = arith.constant 0 : i32
    return %arg0, %arg1 : i32, i32
  }
  func.func @transform_1(%arg0: i32, %arg1: i32) -> (i32, i32) {
    %c0_i32 = arith.constant 0 : i32
    %c0_i32_0 = arith.constant 0 : i32
    %c0_i32_1 = arith.constant 0 : i32
    return %c0_i32, %c0_i32_0 : i32, i32
  }
  func.func @transform_2(%arg0: i32, %arg1: i32) -> (i32, i32) {
    %c0_i32 = arith.constant 0 : i32
    %c0_i32_0 = arith.constant 0 : i32
    return %arg0, %c0_i32 : i32, i32
  }
}

</mosaic_0001>

<llo_original>
// kernel: tpu_custom_call.1
$region0: #{tpu_custom_call.1}
  #allocation0 [shape = 'u32[]', space=smem, size = 0x4, offset = 0x4, fixed_abs, tag = 'smem constant byte address 0x4 - core index']
  #allocation1 [shape = 'u32[144,128]{1,0:T(1,128)}', space=vmem, size = 0x12000, scoped, tag = 'internal scratch']
  #allocation2 [shape = 'f32[128,128]{1,0:T(8,128)}', space=vmem, size = 0x10000, scoped, tag = 'scratch operand']
  %s0 = inlined_call_operand.hbm [shape: bf16[256,256], index: 0, kind: input, shape index: {}]
  %s1 = inlined_call_operand.hbm [shape: bf16[256,128], index: 1, kind: input, shape index: {}]
  %s2 = inlined_call_operand.hbm [shape: bf16[256,128], index: 2, kind: output, shape index: {}]
  %s3 = sld [smem:[#allocation0]]
  $region57: #{tpu_custom_call.1} parent=0
    _
  %s5 = ssub.s32 1, %s3
  %s6 = scalar_select 0, %s5, %s3
  $region1: #{tpu_custom_call.1} parent=0
    #allocation3 [shape = 'u8[65536]{0}', space=vmem, size = 0x10000, scoped, tag = 'input window, operand 0']
    #allocation4 [shape = 's32[2]{0}', space=sflag, size = 0x8, scoped, tag = 'scoped memory for tpu_custom_call.1']
    #allocation5 [shape = 's32[2]{0}', space=sflag, size = 0x8, scoped, tag = 'scoped memory for tpu_custom_call.1']
    #allocation6 [shape = 'u8[65536]{0}', space=vmem, size = 0x10000, scoped, tag = 'input window, operand 1, single buffered']
    #allocation7 [shape = 's32[1]{0}', space=sflag, size = 0x4, scoped, tag = 'scoped memory for tpu_custom_call.1']
    #allocation8 [shape = 'u8[65536]{0}', space=vmem, size = 0x10000, scoped, tag = 'output window, operand 0']
    %7 = vsyncpa [#allocation4], 0
    %s8 = scalar_lea.sflag [#allocation4], 1
    %9 = vsyncpa %s8, 0
    %10 = vsyncpa [#allocation7], 0
    %11 = vsyncpa [#allocation5], 0
    %s12 = scalar_lea.sflag [#allocation5], 1
    %13 = vsyncpa %s12, 0
    loop: start=0, step=1, limit=6
    $region2: #{tpu_custom_call.1} parent=1 // loop_pre_header
      _
    $region3: #{tpu_custom_call.1} parent=1 // loop_header
      %s15 = sphi 0, %s19
      %p16 = scmp.ge.s32.totalorder %s15, 6
      %s22 = sphi 0, %s34
      %s23 = sphi 0, %s30
      %s24 = sphi 0, %s22
      %s25 = sphi 0, %s23
      %s26 = sphi 0, %s24
      %s27 = sphi 0, %s25
      %s39 = sphi 0, %s41
      %s42 = sphi 0, %s39
      %s43 = sphi 0, %s42
      %s59 = sphi 0, %s43
      %s63 = sphi 0, %s63
      %s65 = sphi 0, %s63
      %s66 = sphi 0, %s65
      %s80 = sphi 0, %s66
      %s86 = sphi 0, %s88
      %s89 = sphi 0, %s86
      %s90 = sphi 0, %s89
      %s106 = sphi 0, %s90
    $region4: #{tpu_custom_call.1} parent=1 // loop_header_branch
      %18 = sbr.rel (%p16) target = $region8
    $region5: #{tpu_custom_call.1} parent=1 // loop_body
      %s20 = ssub.s32 %s15, 1
      %s21 = ssub.s32 %s15, 2
      %s28 = sadd.s32 1, %s23
      %p29 = scmp.ge.s32.totalorder %s28, 2
      %s30 = scalar_select %p29, 0, %s28
      %s31 = sadd.s32 1, %s22
      %s32 = scalar_select %p29, %s31, %s22
      %p33 = scmp.ge.s32.totalorder %s32, 2
      %s34 = scalar_select %p33, 0, %s32
      %s35 = ssub.s32 %s22, %s34
      %s36 = ssub.s32 %s23, %s30
      %s37 = sor.u32 %s35, %s36
      %p38 = scmp.eq.s32.totalorder %s37, 0
      %s40 = sadd.s32 %s39, 1
      %s41 = scalar_select %p38, %s39, %s40
      %p44 = pneg %p38
      %p45 = scmp.eq.s32.totalorder %s15, 3
      %p46 = por %p44, %p45
      %p47 = scmp.ne.s32.totalorder %s39, %s42
      %p48 = scmp.eq.s32.totalorder %s15, 0
      %p49 = por %p47, %p48
      %p50 = scmp.ne.s32.totalorder %s39, %s42
      %p51 = scmp.eq.s32.totalorder %s20, 3
      %p52 = por %p50, %p51
      %p53 = scmp.ne.s32.totalorder %s42, %s43
      %p54 = scmp.eq.s32.totalorder %s20, 0
      %p55 = por %p53, %p54
      %p56 = scmp.ne.s32.totalorder %s42, %s43
      %p57 = scmp.eq.s32.totalorder %s21, 3
      %p58 = por %p56, %p57
      %p60 = scmp.ne.s32.totalorder %s43, %s59
      %p61 = scmp.eq.s32.totalorder %s21, 0
      %p62 = por %p60, %p61
      %s64 = sadd.s32 %s63, 1
      %p67 = scmp.eq.s32.totalorder %s15, 3
      %p68 = scmp.ne.s32.totalorder %s63, %s65
      %p69 = scmp.eq.s32.totalorder %s15, 0
      %p70 = por %p68, %p69
      %p71 = scmp.ne.s32.totalorder %s63, %s65
      %p72 = scmp.eq.s32.totalorder %s20, 3
      %p73 = por %p71, %p72
      %p74 = scmp.ne.s32.totalorder %s65, %s66
      %p75 = scmp.eq.s32.totalorder %s20, 0
      %p76 = por %p74, %p75
      %p77 = scmp.ne.s32.totalorder %s65, %s66
      %p78 = scmp.eq.s32.totalorder %s21, 3
      %p79 = por %p77, %p78
      %p81 = scmp.ne.s32.totalorder %s66, %s80
      %p82 = scmp.eq.s32.totalorder %s21, 0
      %p83 = por %p81, %p82
      %s84 = ssub.s32 %s22, %s34
      %p85 = scmp.eq.s32.totalorder %s84, 0
      %s87 = sadd.s32 %s86, 1
      %s88 = scalar_select %p85, %s86, %s87
      %p91 = pneg %p85
      %p92 = scmp.eq.s32.totalorder %s15, 3
      %p93 = por %p91, %p92
      %p94 = scmp.ne.s32.totalorder %s86, %s89
      %p95 = scmp.eq.s32.totalorder %s15, 0
      %p96 = por %p94, %p95
      %p97 = scmp.ne.s32.totalorder %s86, %s89
      %p98 = scmp.eq.s32.totalorder %s20, 3
      %p99 = por %p97, %p98
      %p100 = scmp.ne.s32.totalorder %s89, %s90
      %p101 = scmp.eq.s32.totalorder %s20, 0
      %p102 = por %p100, %p101
      %p103 = scmp.ne.s32.totalorder %s89, %s90
      %p104 = scmp.eq.s32.totalorder %s21, 3
      %p105 = por %p103, %p104
      %p107 = scmp.ne.s32.totalorder %s90, %s106
      %p108 = scmp.eq.s32.totalorder %s21, 0
      %p109 = por %p107, %p108
      %p110 = scmp.le.s32.totalorder 1, %s15
      %p111 = scmp.lt.s32.totalorder %s15, 5
      %p112 = pnand %p110, %p111
      %p113 = pneg %p112
      // Predicated region
      $region9: #{tpu_custom_call.1} parent=5 // pred_check
        _
      $region10: #{tpu_custom_call.1} parent=5 // pred_check_branch
        %115 = sbr.rel (%p112) target = $region12
      $region11: #{tpu_custom_call.1} parent=5 // pred_region
        %s116 = ssub.s32 %s15, 1
        // Predicated region
        $region13: #{tpu_custom_call.1} parent=11 // pred_check
          %p117 = pneg %p76
        $region14: #{tpu_custom_call.1} parent=11 // pred_check_branch
          %119 = sbr.rel (%p117) target = $region16
        $region15: #{tpu_custom_call.1} parent=11 // pred_region
          %s121 = ssub.s32 2048, 2048
          %122 = vsyncadd [#allocation7], %s121
          %s123 = sshll.u32 [#allocation6], 4
          %s124 = int_to_ptr.vmem [resolvable:$true] %s123
          %129 = dma.hbm_to_vmem [thread:$0]  %s1, 2048, %s124, [#allocation7], 64, 64, 4
        $region16: #{tpu_custom_call.1} parent=11 // pred_fallthru
          _
      $region12: #{tpu_custom_call.1} parent=5 // pred_fallthru
        _
      %p130 = scmp.lt.s32.totalorder %s15, 4
      // Predicated region
      $region17: #{tpu_custom_call.1} parent=5 // pred_check
        %p131 = pneg %p130
      $region18: #{tpu_custom_call.1} parent=5 // pred_check_branch
        %133 = sbr.rel (%p131) target = $region20
      $region19: #{tpu_custom_call.1} parent=5 // pred_region
        // Predicated region
        $region21: #{tpu_custom_call.1} parent=19 // pred_check
          %p134 = pneg %p49
        $region22: #{tpu_custom_call.1} parent=19 // pred_check_branch
          %136 = sbr.rel (%p134) target = $region24
        $region23: #{tpu_custom_call.1} parent=19 // pred_region
          %s137 = sand.u32 %s39, 1
          %s138 = scalar_lea.sflag [#allocation4], %s137
          %s139 = sand.u32 %s39, 1
          %s140 = smul.addr %s139, 64
          %s141 = scalar_lea.vmem [#allocation3], %s140
          %s142 = smul.u32 16, %s22
          %s144 = ssub.s32 1024, 1024
          %145 = vsyncadd %s138, %s144
          %s146 = smul.addr %s142, 2
          %s147 = sadd.s32 %s23, %s146
          %s148 = smul.addr %s147, 64
          %s149 = scalar_lea.hbm %s0, %s148
          %s150 = sshll.u32 %s141, 4
          %s151 = int_to_ptr.vmem [resolvable:$true] %s150
          %156 = dma.hbm_to_vmem [thread:$0]  %s149, 1024, %s151, %s138, 128, 64, 4
        $region24: #{tpu_custom_call.1} parent=19 // pred_fallthru
          _
      $region20: #{tpu_custom_call.1} parent=5 // pred_fallthru
        _
      %p157 = scmp.le.s32.totalorder 1, %s15
      %p158 = scmp.lt.s32.totalorder %s15, 5
      %p159 = pnand %p157, %p158
      %p160 = pneg %p159
      // Predicated region
      $region25: #{tpu_custom_call.1} parent=5 // pred_check
        _
      $region26: #{tpu_custom_call.1} parent=5 // pred_check_branch
        %162 = sbr.rel (%p159) target = $region28
      $region27: #{tpu_custom_call.1} parent=5 // pred_region
        %s163 = ssub.s32 %s15, 1
        %s164 = sand.u32 %s42, 1
        %s165 = scalar_lea.sflag [#allocation4], %s164
        %s166 = sand.u32 %s42, 1
        %s167 = smul.addr %s166, 64
        %s168 = scalar_lea.vmem [#allocation3], %s167
        // Predicated region
        $region29: #{tpu_custom_call.1} parent=27 // pred_check
          %p169 = pneg %p55
        $region30: #{tpu_custom_call.1} parent=27 // pred_check_branch
          %171 = sbr.rel (%p169) target = $region32
        $region31: #{tpu_custom_call.1} parent=27 // pred_region
          %172 = dma.done %s165, 1024
        $region32: #{tpu_custom_call.1} parent=27 // pred_fallthru
          _
        // Predicated region
        $region33: #{tpu_custom_call.1} parent=27 // pred_check
          %p173 = pneg %p76
        $region34: #{tpu_custom_call.1} parent=27 // pred_check_branch
          %175 = sbr.rel (%p173) target = $region36
        $region35: #{tpu_custom_call.1} parent=27 // pred_region
          %176 = dma.done [#allocation7], 2048
        $region36: #{tpu_custom_call.1} parent=27 // pred_fallthru
          _
        %s177 = sand.u32 %s42, 1
        %s178 = scalar_lea.sflag [#allocation4], %s177
        %s179 = sand.u32 %s42, 1
        %s180 = smul.addr %s179, 64
        %s181 = scalar_lea.vmem [#allocation3], %s180
        %p182 = pneg %p55
        %p183 = pneg %p52
        %p184 = pneg %p76
        %p185 = pneg %p73
        %p186 = pneg %p102
        %p187 = pneg %p99
        %s188 = sand.u32 %s89, 1
        %s189 = scalar_lea.sflag [#allocation5], %s188
        %s190 = sand.u32 %s89, 1
        %s191 = smul.addr %s190, 64
        %s192 = scalar_lea.vmem [#allocation8], %s191
        %s193 = smul.u32 16, %s24
        %s194 = smul.u32 16, %s24
        %p196 = scmp.eq.s32.totalorder %s25, 0
        // Predicated region
        $region37: #{tpu_custom_call.1} parent=27 // pred_check
          %p197 = pneg %p196
        $region38: #{tpu_custom_call.1} parent=27 // pred_check_branch
          %199 = sbr.rel (%p197) target = $region40
        $region39: #{tpu_custom_call.1} parent=27 // pred_region
          %200 = vst [vmem:[#allocation2] sm:$0xff] 0.0
          %201 = vst [vmem:[#allocation2 + $0x8] sm:$0xff] 0.0
          %202 = vst [vmem:[#allocation2 + $0x10] sm:$0xff] 0.0
          %203 = vst [vmem:[#allocation2 + $0x18] sm:$0xff] 0.0
          %204 = vst [vmem:[#allocation2 + $0x20] sm:$0xff] 0.0
          %205 = vst [vmem:[#allocation2 + $0x28] sm:$0xff] 0.0
          %206 = vst [vmem:[#allocation2 + $0x30] sm:$0xff] 0.0
          %207 = vst [vmem:[#allocation2 + $0x38] sm:$0xff] 0.0
          %208 = vst [vmem:[#allocation2 + $0x40] sm:$0xff] 0.0
          %209 = vst [vmem:[#allocation2 + $0x48] sm:$0xff] 0.0
          %210 = vst [vmem:[#allocation2 + $0x50] sm:$0xff] 0.0
          %211 = vst [vmem:[#allocation2 + $0x58] sm:$0xff] 0.0
          %212 = vst [vmem:[#allocation2 + $0x60] sm:$0xff] 0.0
          %213 = vst [vmem:[#allocation2 + $0x68] sm:$0xff] 0.0
          %214 = vst [vmem:[#allocation2 + $0x70] sm:$0xff] 0.0
          %215 = vst [vmem:[#allocation2 + $0x78] sm:$0xff] 0.0
        $region40: #{tpu_custom_call.1} parent=27 // pred_fallthru
          _
        %s216 = smul.u32 %s25, 128
        %v217 = vld [vmem:[#allocation2] sm:$0xff]
        %v218 = vld [vmem:[#allocation2 + $0x8] sm:$0xff]
        %v219 = vld [vmem:[#allocation2 + $0x10] sm:$0xff]
        %v220 = vld [vmem:[#allocation2 + $0x18] sm:$0xff]
        %v221 = vld [vmem:[#allocation2 + $0x20] sm:$0xff]
        %v222 = vld [vmem:[#allocation2 + $0x28] sm:$0xff]
        %v223 = vld [vmem:[#allocation2 + $0x30] sm:$0xff]
        %v224 = vld [vmem:[#allocation2 + $0x38] sm:$0xff]
        %v225 = vld [vmem:[#allocation2 + $0x40] sm:$0xff]
        %v226 = vld [vmem:[#allocation2 + $0x48] sm:$0xff]
        %v227 = vld [vmem:[#allocation2 + $0x50] sm:$0xff]
        %v228 = vld [vmem:[#allocation2 + $0x58] sm:$0xff]
        %v229 = vld [vmem:[#allocation2 + $0x60] sm:$0xff]
        %v230 = vld [vmem:[#allocation2 + $0x68] sm:$0xff]
        %v231 = vld [vmem:[#allocation2 + $0x70] sm:$0xff]
        %v232 = vld [vmem:[#allocation2 + $0x78] sm:$0xff]
        %v233 = vld [vmem:[%s168] sm:$0xf]
        %v234 = vld [vmem:[%s168 + $0x4] sm:$0xf]
        %v235 = vld [vmem:[%s168 + $0x8] sm:$0xf]
        %v236 = vld [vmem:[%s168 + $0xc] sm:$0xf]
        %v237 = vld [vmem:[%s168 + $0x10] sm:$0xf]
        %v238 = vld [vmem:[%s168 + $0x14] sm:$0xf]
        %v239 = vld [vmem:[%s168 + $0x18] sm:$0xf]
        %v240 = vld [vmem:[%s168 + $0x1c] sm:$0xf]
        %v241 = vld [vmem:[%s168 + $0x20] sm:$0xf]
        %v242 = vld [vmem:[%s168 + $0x24] sm:$0xf]
        %v243 = vld [vmem:[%s168 + $0x28] sm:$0xf]
        %v244 = vld [vmem:[%s168 + $0x2c] sm:$0xf]
        %v245 = vld [vmem:[%s168 + $0x30] sm:$0xf]
        %v246 = vld [vmem:[%s168 + $0x34] sm:$0xf]
        %v247 = vld [vmem:[%s168 + $0x38] sm:$0xf]
        %v248 = vld [vmem:[%s168 + $0x3c] sm:$0xf]
        %s249 = sshra.s32 %s216, 3
        %s250 = sand.u32 %s216, 7
        %s251 = smul.addr %s249, 4
        %s252 = scalar_lea.vmem [#allocation6], %s251
        %v253 = vld [vmem:[%s252] sm:$0xf]
        %v254 = vld [vmem:[%s252 + $0x4] sm:$0xf]
        %v255 = vld [vmem:[%s252 + $0x8] sm:$0xf]
        %v256 = vld [vmem:[%s252 + $0xc] sm:$0xf]
        %v257 = vld [vmem:[%s252 + $0x10] sm:$0xf]
        %v258 = vld [vmem:[%s252 + $0x14] sm:$0xf]
        %v259 = vld [vmem:[%s252 + $0x18] sm:$0xf]
        %v260 = vld [vmem:[%s252 + $0x1c] sm:$0xf]
        %v261 = vld [vmem:[%s252 + $0x20] sm:$0xf]
        %v262 = vld [vmem:[%s252 + $0x24] sm:$0xf]
        %v263 = vld [vmem:[%s252 + $0x28] sm:$0xf]
        %v264 = vld [vmem:[%s252 + $0x2c] sm:$0xf]
        %v265 = vld [vmem:[%s252 + $0x30] sm:$0xf]
        %v266 = vld [vmem:[%s252 + $0x34] sm:$0xf]
        %v267 = vld [vmem:[%s252 + $0x38] sm:$0xf]
        %v268 = vld [vmem:[%s252 + $0x3c] sm:$0xf]
        %v285 = vunpack.c.l.b16 %v233
        %v286 = vunpack.c.l.b16 %v234
        %v287 = vunpack.c.l.b16 %v235
        %v288 = vunpack.c.l.b16 %v236
        %v289 = vunpack.c.l.b16 %v237
        %v290 = vunpack.c.l.b16 %v238
        %v291 = vunpack.c.l.b16 %v239
        %v292 = vunpack.c.l.b16 %v240
        %v293 = vunpack.c.l.b16 %v241
        %v294 = vunpack.c.l.b16 %v242
        %v295 = vunpack.c.l.b16 %v243
        %v296 = vunpack.c.l.b16 %v244
        %v297 = vunpack.c.l.b16 %v245
        %v298 = vunpack.c.l.b16 %v246
        %v299 = vunpack.c.l.b16 %v247
        %v300 = vunpack.c.l.b16 %v248
        %v301 = vpack.c.b16 %v286, %v285
        %v302 = vpack.c.b16 %v288, %v287
        %v303 = vpack.c.b16 %v290, %v289
        %v304 = vpack.c.b16 %v292, %v291
        %v305 = vpack.c.b16 %v294, %v293
        %v306 = vpack.c.b16 %v296, %v295
        %v307 = vpack.c.b16 %v298, %v297
        %v308 = vpack.c.b16 %v300, %v299
        %v333 = vunpack.c.l.b16 %v253
        %v334 = vunpack.c.l.b16 %v254
        %v335 = vunpack.c.l.b16 %v255
        %v336 = vunpack.c.l.b16 %v256
        %v337 = vunpack.c.l.b16 %v257
        %v338 = vunpack.c.l.b16 %v258
        %v339 = vunpack.c.l.b16 %v259
        %v340 = vunpack.c.l.b16 %v260
        %v341 = vunpack.c.l.b16 %v261
        %v342 = vunpack.c.l.b16 %v262
        %v343 = vunpack.c.l.b16 %v263
        %v344 = vunpack.c.l.b16 %v264
        %v345 = vunpack.c.l.b16 %v265
        %v346 = vunpack.c.l.b16 %v266
        %v347 = vunpack.c.l.b16 %v267
        %v348 = vunpack.c.l.b16 %v268
        %v349 = vpack.c.b16 %v334, %v333
        %v350 = vpack.c.b16 %v336, %v335
        %v351 = vpack.c.b16 %v338, %v337
        %v352 = vpack.c.b16 %v340, %v339
        %v353 = vpack.c.b16 %v342, %v341
        %v354 = vpack.c.b16 %v344, %v343
        %v355 = vpack.c.b16 %v346, %v345
        %v356 = vpack.c.b16 %v348, %v347
        %365 = vmatprep.subr.bf16.mxu0 0
        %366 = vmatpush1.bf16.msra.mxu0 %v356
        %367 = vmatprep.subr.bf16.mxu0 0
        %368 = vmatpush1.bf16.msra.mxu0 %v355
        %369 = vmatprep.subr.bf16.mxu0 0
        %370 = vmatpush1.bf16.msra.mxu0 %v354
        %371 = vmatprep.subr.bf16.mxu0 0
        %372 = vmatpush1.bf16.msra.mxu0 %v353
        %373 = vmatprep.subr.bf16.mxu0 0
        %374 = vmatpush1.bf16.msra.mxu0 %v352
        %375 = vmatprep.subr.bf16.mxu0 0
        %376 = vmatpush1.bf16.msra.mxu0 %v351
        %377 = vmatprep.subr.bf16.mxu0 0
        %378 = vmatpush1.bf16.msra.mxu0 %v350
        %379 = vmatprep.subr.bf16.mxu0 0
        %380 = vmatpush1.bf16.msra.mxu0 %v349
        %381 = vmatprep.subr.bf16.mxu0 0
        %382 = vmatpush2.bf16.msra.mxu0 0
        %383 = vmatprep.subr.bf16.mxu0 0
        %384 = vmatpush2.bf16.msra.mxu0 0
        %385 = vmatprep.subr.bf16.mxu0 0
        %386 = vmatpush2.bf16.msra.mxu0 0
        %387 = vmatprep.subr.bf16.mxu0 0
        %388 = vmatpush2.bf16.msra.mxu0 0
        %389 = vmatprep.subr.bf16.mxu0 0
        %390 = vmatpush2.bf16.msra.mxu0 0
        %391 = vmatprep.subr.bf16.mxu0 0
        %392 = vmatpush2.bf16.msra.mxu0 0
        %393 = vmatprep.subr.bf16.mxu0 0
        %394 = vmatpush2.bf16.msra.mxu0 0
        %395 = vmatprep.subr.bf16.mxu0 0
        %396 = vmatpush2.bf16.msra.mxu0 0
        %397 = vmatprep.mubr.bf16.mxu0 0
        %398 = vmatmul.mubr.bf16.gmra.mxu0 %v301
        %v399 = vpop.f32.mrf.mxu0
        %v400 = vadd.f32 0.0, %v399
        %v401 = vpop.f32.mrf.mxu0
        %v402 = vpop.f32.mrf.mxu0
        %v403 = vadd.f32 0.0, %v402
        %v404 = vpop.f32.mrf.mxu0
        %405 = vmatprep.mubr.bf16.mxu0 0
        %406 = vmatmul.mubr.bf16.gmra.mxu0 %v302
        %v407 = vpop.f32.mrf.mxu0
        %v408 = vadd.f32 0.0, %v407
        %v409 = vpop.f32.mrf.mxu0
        %v410 = vpop.f32.mrf.mxu0
        %v411 = vadd.f32 0.0, %v410
        %v412 = vpop.f32.mrf.mxu0
        %413 = vmatprep.mubr.bf16.mxu0 0
        %414 = vmatmul.mubr.bf16.gmra.mxu0 %v303
        %v415 = vpop.f32.mrf.mxu0
        %v416 = vadd.f32 0.0, %v415
        %v417 = vpop.f32.mrf.mxu0
        %v418 = vpop.f32.mrf.mxu0
        %v419 = vadd.f32 0.0, %v418
        %v420 = vpop.f32.mrf.mxu0
        %421 = vmatprep.mubr.bf16.mxu0 0
        %422 = vmatmul.mubr.bf16.gmra.mxu0 %v304
        %v423 = vpop.f32.mrf.mxu0
        %v424 = vadd.f32 0.0, %v423
        %v425 = vpop.f32.mrf.mxu0
        %v426 = vpop.f32.mrf.mxu0
        %v427 = vadd.f32 0.0, %v426
        %v428 = vpop.f32.mrf.mxu0
        %429 = vmatprep.mubr.bf16.mxu0 0
        %430 = vmatmul.mubr.bf16.gmra.mxu0 %v305
        %v431 = vpop.f32.mrf.mxu0
        %v432 = vadd.f32 0.0, %v431
        %v433 = vpop.f32.mrf.mxu0
        %v434 = vpop.f32.mrf.mxu0
        %v435 = vadd.f32 0.0, %v434
        %v436 = vpop.f32.mrf.mxu0
        %437 = vmatprep.mubr.bf16.mxu0 0
        %438 = vmatmul.mubr.bf16.gmra.mxu0 %v306
        %v439 = vpop.f32.mrf.mxu0
        %v440 = vadd.f32 0.0, %v439
        %v441 = vpop.f32.mrf.mxu0
        %v442 = vpop.f32.mrf.mxu0
        %v443 = vadd.f32 0.0, %v442
        %v444 = vpop.f32.mrf.mxu0
        %445 = vmatprep.mubr.bf16.mxu0 0
        %446 = vmatmul.mubr.bf16.gmra.mxu0 %v307
        %v447 = vpop.f32.mrf.mxu0
        %v448 = vadd.f32 0.0, %v447
        %v449 = vpop.f32.mrf.mxu0
        %v450 = vpop.f32.mrf.mxu0
        %v451 = vadd.f32 0.0, %v450
        %v452 = vpop.f32.mrf.mxu0
        %453 = vmatprep.mubr.bf16.mxu0 0
        %454 = vmatmul.mubr.bf16.gmra.mxu0 %v308
        %v455 = vpop.f32.mrf.mxu0
        %v456 = vadd.f32 0.0, %v455
        %v457 = vpop.f32.mrf.mxu0
        %v458 = vpop.f32.mrf.mxu0
        %v459 = vadd.f32 0.0, %v458
        %v460 = vpop.f32.mrf.mxu0
        %461 = vdwg.mxu0
        %v462 = vadd.f32 %v217, %v400
        %v463 = vadd.f32 %v218, %v403
        %v464 = vadd.f32 %v219, %v408
        %v465 = vadd.f32 %v220, %v411
        %v466 = vadd.f32 %v221, %v416
        %v467 = vadd.f32 %v222, %v419
        %v468 = vadd.f32 %v223, %v424
        %v469 = vadd.f32 %v224, %v427
        %v470 = vadd.f32 %v225, %v432
        %v471 = vadd.f32 %v226, %v435
        %v472 = vadd.f32 %v227, %v440
        %v473 = vadd.f32 %v228, %v443
        %v474 = vadd.f32 %v229, %v448
        %v475 = vadd.f32 %v230, %v451
        %v476 = vadd.f32 %v231, %v456
        %v477 = vadd.f32 %v232, %v459
        %478 = vst [vmem:[#allocation2] sm:$0xff] %v462
        %479 = vst [vmem:[#allocation2 + $0x8] sm:$0xff] %v463
        %480 = vst [vmem:[#allocation2 + $0x10] sm:$0xff] %v464
        %481 = vst [vmem:[#allocation2 + $0x18] sm:$0xff] %v465
        %482 = vst [vmem:[#allocation2 + $0x20] sm:$0xff] %v466
        %483 = vst [vmem:[#allocation2 + $0x28] sm:$0xff] %v467
        %484 = vst [vmem:[#allocation2 + $0x30] sm:$0xff] %v468
        %485 = vst [vmem:[#allocation2 + $0x38] sm:$0xff] %v469
        %486 = vst [vmem:[#allocation2 + $0x40] sm:$0xff] %v470
        %487 = vst [vmem:[#allocation2 + $0x48] sm:$0xff] %v471
        %488 = vst [vmem:[#allocation2 + $0x50] sm:$0xff] %v472
        %489 = vst [vmem:[#allocation2 + $0x58] sm:$0xff] %v473
        %490 = vst [vmem:[#allocation2 + $0x60] sm:$0xff] %v474
        %491 = vst [vmem:[#allocation2 + $0x68] sm:$0xff] %v475
        %492 = vst [vmem:[#allocation2 + $0x70] sm:$0xff] %v476
        %493 = vst [vmem:[#allocation2 + $0x78] sm:$0xff] %v477
        %p494 = scmp.eq.s32.totalorder %s25, 1
        // Predicated region
        $region41: #{tpu_custom_call.1} parent=27 // pred_check
          %p495 = pneg %p494
        $region42: #{tpu_custom_call.1} parent=27 // pred_check_branch
          %497 = sbr.rel (%p495) target = $region44
        $region43: #{tpu_custom_call.1} parent=27 // pred_region
          %v498 = vld [vmem:[#allocation2] sm:$0xff]
          %v499 = vld [vmem:[#allocation2 + $0x8] sm:$0xff]
          %v500 = vld [vmem:[#allocation2 + $0x10] sm:$0xff]
          %v501 = vld [vmem:[#allocation2 + $0x18] sm:$0xff]
          %v502 = vld [vmem:[#allocation2 + $0x20] sm:$0xff]
          %v503 = vld [vmem:[#allocation2 + $0x28] sm:$0xff]
          %v504 = vld [vmem:[#allocation2 + $0x30] sm:$0xff]
          %v505 = vld [vmem:[#allocation2 + $0x38] sm:$0xff]
          %v506 = vld [vmem:[#allocation2 + $0x40] sm:$0xff]
          %v507 = vld [vmem:[#allocation2 + $0x48] sm:$0xff]
          %v508 = vld [vmem:[#allocation2 + $0x50] sm:$0xff]
          %v509 = vld [vmem:[#allocation2 + $0x58] sm:$0xff]
          %v510 = vld [vmem:[#allocation2 + $0x60] sm:$0xff]
          %v511 = vld [vmem:[#allocation2 + $0x68] sm:$0xff]
          %v512 = vld [vmem:[#allocation2 + $0x70] sm:$0xff]
          %v513 = vld [vmem:[#allocation2 + $0x78] sm:$0xff]
          %v514 = vpack.c.bf16 %v499, %v498
          %v515 = vpack.c.bf16 %v501, %v500
          %v516 = vpack.c.bf16 %v503, %v502
          %v517 = vpack.c.bf16 %v505, %v504
          %v518 = vpack.c.bf16 %v507, %v506
          %v519 = vpack.c.bf16 %v509, %v508
          %v520 = vpack.c.bf16 %v511, %v510
          %v521 = vpack.c.bf16 %v513, %v512
          %v530 = vunpack.c.l.b16 %v514
          %v531 = vunpack.c.h.b16 %v514
          %v532 = vunpack.c.l.b16 %v515
          %v533 = vunpack.c.h.b16 %v515
          %v534 = vunpack.c.l.b16 %v516
          %v535 = vunpack.c.h.b16 %v516
          %v536 = vunpack.c.l.b16 %v517
          %v537 = vunpack.c.h.b16 %v517
          %v538 = vunpack.c.l.b16 %v518
          %v539 = vunpack.c.h.b16 %v518
          %v540 = vunpack.c.l.b16 %v519
          %v541 = vunpack.c.h.b16 %v519
          %v542 = vunpack.c.l.b16 %v520
          %v543 = vunpack.c.h.b16 %v520
          %v544 = vunpack.c.l.b16 %v521
          %v545 = vunpack.c.h.b16 %v521
          %v546 = vpack.c.b16 %v530, %v530
          %v547 = vpack.c.b16 %v531, %v531
          %v548 = vpack.c.b16 %v532, %v532
          %v549 = vpack.c.b16 %v533, %v533
          %v550 = vpack.c.b16 %v534, %v534
          %v551 = vpack.c.b16 %v535, %v535
          %v552 = vpack.c.b16 %v536, %v536
          %v553 = vpack.c.b16 %v537, %v537
          %v554 = vpack.c.b16 %v538, %v538
          %v555 = vpack.c.b16 %v539, %v539
          %v556 = vpack.c.b16 %v540, %v540
          %v557 = vpack.c.b16 %v541, %v541
          %v558 = vpack.c.b16 %v542, %v542
          %v559 = vpack.c.b16 %v543, %v543
          %v560 = vpack.c.b16 %v544, %v544
          %v561 = vpack.c.b16 %v545, %v545
          %578 = vst [vmem:[%s192] sm:$0xf] %v546
          %579 = vst [vmem:[%s192 + $0x4] sm:$0xf] %v547
          %580 = vst [vmem:[%s192 + $0x8] sm:$0xf] %v548
          %581 = vst [vmem:[%s192 + $0xc] sm:$0xf] %v549
          %582 = vst [vmem:[%s192 + $0x10] sm:$0xf] %v550
          %583 = vst [vmem:[%s192 + $0x14] sm:$0xf] %v551
          %584 = vst [vmem:[%s192 + $0x18] sm:$0xf] %v552
          %585 = vst [vmem:[%s192 + $0x1c] sm:$0xf] %v553
          %586 = vst [vmem:[%s192 + $0x20] sm:$0xf] %v554
          %587 = vst [vmem:[%s192 + $0x24] sm:$0xf] %v555
          %588 = vst [vmem:[%s192 + $0x28] sm:$0xf] %v556
          %589 = vst [vmem:[%s192 + $0x2c] sm:$0xf] %v557
          %590 = vst [vmem:[%s192 + $0x30] sm:$0xf] %v558
          %591 = vst [vmem:[%s192 + $0x34] sm:$0xf] %v559
          %592 = vst [vmem:[%s192 + $0x38] sm:$0xf] %v560
          %593 = vst [vmem:[%s192 + $0x3c] sm:$0xf] %v561
        $region44: #{tpu_custom_call.1} parent=27 // pred_fallthru
          _
        %s594 = sand.u32 %s89, 1
        %s595 = scalar_lea.sflag [#allocation5], %s594
        %s596 = sand.u32 %s89, 1
        %s597 = smul.addr %s596, 64
        %s598 = scalar_lea.vmem [#allocation8], %s597
        // Predicated region
        $region45: #{tpu_custom_call.1} parent=27 // pred_check
          %p599 = pneg %p99
        $region46: #{tpu_custom_call.1} parent=27 // pred_check_branch
          %601 = sbr.rel (%p599) target = $region48
        $region47: #{tpu_custom_call.1} parent=27 // pred_region
          %s602 = smul.u32 16, %s24
          %s604 = ssub.s32 1024, 1024
          %605 = vsyncadd %s595, %s604
          %s606 = smul.addr %s602, 64
          %s607 = scalar_lea.hbm %s2, %s606
          %s608 = sshll.u32 %s598, 4
          %s609 = int_to_ptr.vmem [resolvable:$true] %s608
          %614 = dma.vmem_to_hbm [thread:$0]  %s609, 1024, %s607, %s595, 64, 64, 4
        $region48: #{tpu_custom_call.1} parent=27 // pred_fallthru
          _
      $region28: #{tpu_custom_call.1} parent=5 // pred_fallthru
        _
      %p615 = scmp.le.s32.totalorder 2, %s15
      // Predicated region
      $region49: #{tpu_custom_call.1} parent=5 // pred_check
        %p616 = pneg %p615
      $region50: #{tpu_custom_call.1} parent=5 // pred_check_branch
        %618 = sbr.rel (%p616) target = $region52
      $region51: #{tpu_custom_call.1} parent=5 // pred_region
        %s619 = ssub.s32 %s15, 2
        // Predicated region
        $region53: #{tpu_custom_call.1} parent=51 // pred_check
          %p620 = pneg %p105
        $region54: #{tpu_custom_call.1} parent=51 // pred_check_branch
          %622 = sbr.rel (%p620) target = $region56
        $region55: #{tpu_custom_call.1} parent=51 // pred_region
          %s623 = sand.u32 %s90, 1
          %s624 = scalar_lea.sflag [#allocation5], %s623
          %s625 = sand.u32 %s90, 1
          %s626 = smul.addr %s625, 64
          %s627 = scalar_lea.vmem [#allocation8], %s626
          %628 = dma.done %s624, 1024
        $region56: #{tpu_custom_call.1} parent=51 // pred_fallthru
          _
      $region52: #{tpu_custom_call.1} parent=5 // pred_fallthru
        _
    $region6: #{tpu_custom_call.1} parent=1 // loop_footer
      %s19 = sadd.s32 1, %s15
    $region7: #{tpu_custom_call.1} parent=1 // loop_footer_branch
      %14 = sbr.rel target = $region3
    $region8: #{tpu_custom_call.1} parent=1 // loop_exit
      _
    %629 = vsyncpa [#allocation4], 1
    %s630 = scalar_lea.sflag [#allocation4], 1
    %631 = vsyncpa %s630, 1
    %632 = vsyncpa [#allocation7], 1
    %633 = vsyncpa [#allocation5], 1
    %s634 = scalar_lea.sflag [#allocation5], 1
    %635 = vsyncpa %s634, 1

</llo_original>
